<compile_context>
chip_gen: v5e
topology: v5e:2x2
jax: 0.10.0
libtpu: 0.0.40
codegen_flags: <defaults>
</compile_context>

<pallas_src>
import jax
import jax.numpy as jnp
from jax import lax
from jax.experimental import pallas as pl
from jax.experimental.pallas import tpu as pltpu


# ---------------------------------------------------------------------------
# Kernels
# ---------------------------------------------------------------------------

def _max_kernel(x_ref, v_ref, i_ref):
    """Unpacked path (W >= 128 or packing not applicable).

    x_ref: [T, W] float ; v_ref: [T, 1] float ; i_ref: [T, 1] int32
    """
    x = x_ref[...]
    T, W = x.shape

    # Max over the last (lane) axis, keepdim.
    vmax = jnp.max(x, axis=-1, keepdims=True)

    # First-occurrence argmax via iota + where + min-reduce.  The isnan() term
    # guarantees at least one True per row even when the row max is NaN
    # (NaN == NaN is False), keeping the index in range and matching torch's
    # "NaN propagates, return its index" behaviour.
    col = lax.broadcasted_iota(jnp.int32, (T, W), dimension=1)
    is_max = (x == vmax) | jnp.isnan(x)
    idx = jnp.min(jnp.where(is_max, col, jnp.int32(W - 1)),
                  axis=-1, keepdims=True)

    v_ref[...] = vmax + jnp.asarray(1.0, dtype=x.dtype)
    i_ref[...] = idx + 1


def _make_packed_max_kernel(w: int, k: int):
    """Packed path for small W: k logical rows of width w share one VMEM row.

    x_ref: [T, k*w] float ; v_ref: [T, k] float ; i_ref: [T, k] int32
    Column j of the outputs corresponds to logical row (packed_row * k + j).

    Implemented with masked full-width segmented reductions (iota / compare /
    where / max / min only) so no lane-reshape or transpose is needed.
    """
    def kernel(x_ref, v_ref, i_ref):
        x = x_ref[...]
        T, KW = x.shape

        col = lax.broadcasted_iota(jnp.int32, (T, KW), dimension=1)
        nan_mask = jnp.isnan(x)
        out_col = lax.broadcasted_iota(jnp.int32, (T, k), dimension=1)

        v_out = jnp.zeros((T, k), dtype=x.dtype)
        i_out = jnp.zeros((T, k), dtype=jnp.int32)

        for j in range(k):  # static unroll, k <= 16
            lo = j * w
            in_seg = (col >= lo) & (col < lo + w)
            xj = jnp.where(in_seg, x, -jnp.inf)
            vmax_j = jnp.max(xj, axis=-1, keepdims=True)            # [T, 1]
            is_max_j = ((x == vmax_j) | nan_mask) & in_seg
            idx_j = jnp.min(jnp.where(is_max_j, col - lo, jnp.int32(w - 1)),
                            axis=-1, keepdims=True)                 # [T, 1]
            sel = out_col == j
            v_out = jnp.where(sel, vmax_j, v_out)
            i_out = jnp.where(sel, idx_j, i_out)

        v_ref[...] = v_out + jnp.asarray(1.0, dtype=x.dtype)
        i_ref[...] = i_out + 1

    return kernel


# ---------------------------------------------------------------------------
# Generation-aware VMEM / tile planning
# ---------------------------------------------------------------------------

def _vmem_plan():
    """Return (vmem_limit_bytes, tile_budget_bytes) for the current chip."""
    try:
        vmem_cap = int(pltpu.get_tpu_info().vmem_capacity_bytes)
    except Exception:
        vmem_cap = 64 * 1024 * 1024   # conservative: v7x per-core VMEM
    # Explicit scoped-VMEM limit (defaults differ per generation: 16/32 MiB);
    # leave ~30% physical headroom (v7x: ~45 MiB of 64; v5e/v6e: ~90 of 128).
    vmem_limit = min(int(vmem_cap * 0.70), 96 * 1024 * 1024)
    # Leave headroom under the limit for Mosaic-internal scratch.
    tile_budget = int(vmem_limit * 0.75)
    return vmem_limit, tile_budget


def _pick_tile_rows(rows: int, lane_width: int, budget_bytes: int,
                    itemsize: int = 4) -> int:
    """Pick a row-tile size so the full per-step live set fits the budget."""
    lane_pad = max(128, -(-lane_width // 128) * 128)   # VMEM pads lanes to 128
    in_per_row = 2 * lane_pad * itemsize               # double-buffered input
    tmp_per_row = 3 * lane_pad * 4                     # argmax-path temporaries
    out_per_row = 2 * 2 * 128 * 4                      # 2 outs, 2 bufs, lane-padded
    per_row = in_per_row + tmp_per_row + out_per_row
    tile = budget_bytes // per_row
    # Keep a single input buffer at <= ~8 MiB (amortization is long saturated
    # vs. the ~0.35 us per-step cost; bounds code size / compile time).
    tile = min(tile, (8 * 1024 * 1024) // (lane_pad * itemsize))
    if tile >= rows:
        return rows                                    # full extent: always legal
    return max(8, (tile // 8) * 8)                     # sublane (8) divisibility


# ---------------------------------------------------------------------------
# Wrapper
# ---------------------------------------------------------------------------

def model_with_max(x: jax.Array, *, tile_rows: int | None = None):
    """x: [N, C, H, W] float -> (values+1 [N,C,H,1], indices+1 [N,C,H,1] int32)."""
    N, C, H, W = x.shape
    R = N * C * H
    itemsize = jnp.dtype(x.dtype).itemsize

    vmem_limit, tile_budget = _vmem_plan()

    # --- small-W lane packing ------------------------------------------------
    k = 1
    if W < 128:
        max_k = min(128 // W, 16)
        for cand in range(max_k, 1, -1):
            if R % cand == 0:
                k = cand
                break

    if k > 1:
        rows2d, width2d = R // k, k * W
        x2d = x.reshape(rows2d, width2d)               # free, row-major view
        kernel = _make_packed_max_kernel(W, k)
        out_last = k
    else:
        rows2d, width2d = R, W
        x2d = x.reshape(rows2d, width2d)
        kernel = _max_kernel
        out_last = 1

    if tile_rows is None:
        tile_rows = _pick_tile_rows(rows2d, width2d, tile_budget, itemsize)
    tile_rows = min(tile_rows, rows2d)
    if tile_rows < rows2d:
        tile_rows = max(8, (tile_rows // 8) * 8)
    # Rows are independent; the padded final tile computes on garbage rows and
    # Pallas masks the out-of-range portion of the output writeback.
    grid_r = pl.cdiv(rows2d, tile_rows)

    cost = pl.CostEstimate(
        flops=3 * R * W,
        transcendentals=0,
        bytes_accessed=R * W * itemsize + R * itemsize + R * 4,
    )

    v2d, i2d = pl.pallas_call(
        kernel,
        out_shape=(
            jax.ShapeDtypeStruct((rows2d, out_last), x.dtype),
            jax.ShapeDtypeStruct((rows2d, out_last), jnp.int32),
        ),
        grid_spec=pltpu.PrefetchScalarGridSpec(
            num_scalar_prefetch=0,
            grid=(grid_r,),
            in_specs=[pl.BlockSpec((tile_rows, width2d), lambda i: (i, 0))],
            out_specs=[
                pl.BlockSpec((tile_rows, out_last), lambda i: (i, 0)),
                pl.BlockSpec((tile_rows, out_last), lambda i: (i, 0)),
            ],
        ),
        compiler_params=pltpu.CompilerParams(
            dimension_semantics=("parallel",),
            vmem_limit_bytes=vmem_limit,
        ),
        cost_estimate=cost,
    )(x2d)

    # (rows2d, out_last) is row-major == logical row order, so a plain reshape
    # recovers the torch output shape for both the packed and unpacked paths.
    return v2d.reshape(N, C, H, 1), i2d.reshape(N, C, H, 1)


# ---------------------------------------------------------------------------
# Self-test
# ---------------------------------------------------------------------------

if __name__ == "__main__":
    key = jax.random.PRNGKey(0)
    k1, k2, k3 = jax.random.split(key, 3)

    def reference(x):
        v = jnp.max(x, axis=-1, keepdims=True) + 1.0
        i = jnp.argmax(x, axis=-1, keepdims=True).astype(jnp.int32) + 1
        return v, i

    # Case 1: canonical INPUT_SIZE = [1, 1, 32, 32].
    # W=32 -> packed path (k=4, 8 packed rows x 128 lanes), single block.
    x1 = jax.random.normal(k1, (1, 1, 32, 32), dtype=jnp.float32)
    v1, i1 = model_with_max(x1)
    jax.block_until_ready((v1, i1))
    rv1, ri1 = reference(x1)
    assert v1.shape == (1, 1, 32, 1) and i1.shape == (1, 1, 32, 1)
    assert jnp.allclose(v1, rv1)
    assert jnp.array_equal(i1, ri1)

    # Case 2: packed path with a multi-step grid and a padded final tile.
    # R = 2*4*50 = 400 rows, W=32 -> k=4 -> 100 packed rows; tile_rows=64 ->
    # grid of 2 with 36 valid rows in the last tile.
    x2 = jax.random.normal(k2, (2, 4, 50, 32), dtype=jnp.float32)
    v2, i2 = model_with_max(x2, tile_rows=64)
    jax.block_until_ready((v2, i2))
    rv2, ri2 = reference(x2)
    assert v2.shape == (2, 4, 50, 1) and i2.shape == (2, 4, 50, 1)
    assert jnp.allclose(v2, rv2)
    assert jnp.array_equal(i2, ri2)

    # Case 3: unpacked fallback (W=160 >= 128) with a padded final row tile.
    # R = 400 rows, tile_rows=128 -> grid of 4.
    x3 = jax.random.normal(k3, (2, 4, 50, 160), dtype=jnp.float32)
    v3, i3 = model_with_max(x3, tile_rows=128)
    jax.block_until_ready((v3, i3))
    rv3, ri3 = reference(x3)
    assert v3.shape == (2, 4, 50, 1) and i3.shape == (2, 4, 50, 1)
    assert jnp.allclose(v3, rv3)
    assert jnp.array_equal(i3, ri3)

    print("KERNEL_OK")
</pallas_src>

<mosaic_0001>
module attributes {stable_mosaic.version = 11 : i64} {
  func.func @kernel(%arg0: i32, %arg1: memref<8x128xf32, #tpu.memory_space<vmem>>, %arg2: memref<8x4xf32, #tpu.memory_space<vmem>>, %arg3: memref<8x4xi32, #tpu.memory_space<vmem>>) attributes {dimension_semantics = [#tpu.dimension_semantics<parallel>], iteration_bounds = array<i64: 1>, scalar_prefetch = 0 : i64, scratch_operands = 0 : i64, tpu.core_type = #tpu.core_type<tc>, window_params = [{transform_indices = @transform_0, window_bounds = array<i64: 8, 128>}, {transform_indices = @transform_1, window_bounds = array<i64: 8, 4>}, {transform_indices = @transform_2, window_bounds = array<i64: 8, 4>}]} {
    %c0 = arith.constant 0 : index
    %c0_0 = arith.constant 0 : index
    %0 = vector.load %arg1[%c0, %c0_0] : memref<8x128xf32, #tpu.memory_space<vmem>>, vector<8x128xf32>
    %1 = tpu.iota {dimensions = array<i32: 1>} : vector<8x128xi32>
    %2 = arith.cmpf one, %0, %0 : vector<8x128xf32>
    %3 = tpu.iota {dimensions = array<i32: 1>} : vector<8x4xi32>
    %cst = arith.constant 0.000000e+00 : f32
    %4 = vector.broadcast %cst : f32 to vector<8x4xf32>
    %c0_i32 = arith.constant 0 : i32
    %5 = vector.broadcast %c0_i32 : i32 to vector<8x4xi32>
    %c0_i32_1 = arith.constant 0 : i32
    %6 = vector.broadcast %c0_i32_1 : i32 to vector<8x128xi32>
    %7 = arith.cmpi sge, %1, %6 : vector<8x128xi32>
    %c32_i32 = arith.constant 32 : i32
    %8 = vector.broadcast %c32_i32 : i32 to vector<8x128xi32>
    %9 = arith.cmpi slt, %1, %8 : vector<8x128xi32>
    %10 = arith.andi %7, %9 : vector<8x128xi1>
    %cst_2 = arith.constant 0xFF800000 : f32
    %11 = vector.broadcast %cst_2 : f32 to vector<8x128xf32>
    %12 = arith.select %10, %0, %11 : vector<8x128xi1>, vector<8x128xf32>
    %cst_3 = arith.constant dense<0xFF800000> : vector<8xf32>
    %13 = vector.multi_reduction <maximumf>, %12, %cst_3 [1] : vector<8x128xf32> to vector<8xf32>
    %14 = vector.shape_cast %13 : vector<8xf32> to vector<8x1xf32>
    %15 = vector.broadcast %14 : vector<8x1xf32> to vector<8x128xf32>
    %16 = arith.cmpf oeq, %0, %15 : vector<8x128xf32>
    %17 = arith.ori %16, %2 : vector<8x128xi1>
    %18 = arith.andi %17, %10 : vector<8x128xi1>
    %c0_i32_4 = arith.constant 0 : i32
    %19 = vector.broadcast %c0_i32_4 : i32 to vector<8x128xi32>
    %20 = arith.subi %1, %19 : vector<8x128xi32>
    %c31_i32 = arith.constant 31 : i32
    %21 = vector.broadcast %c31_i32 : i32 to vector<8x128xi32>
    %22 = arith.select %18, %20, %21 : vector<8x128xi1>, vector<8x128xi32>
    %cst_5 = arith.constant dense<2147483647> : vector<8xi32>
    %23 = vector.multi_reduction <minsi>, %22, %cst_5 [1] : vector<8x128xi32> to vector<8xi32>
    %24 = vector.shape_cast %23 : vector<8xi32> to vector<8x1xi32>
    %c0_i32_6 = arith.constant 0 : i32
    %25 = vector.broadcast %c0_i32_6 : i32 to vector<8x4xi32>
    %26 = arith.cmpi eq, %3, %25 : vector<8x4xi32>
    %27 = vector.shape_cast %14 : vector<8x1xf32> to vector<8x1xf32>
    %28 = vector.broadcast %27 : vector<8x1xf32> to vector<8x4xf32>
    %29 = arith.select %26, %28, %4 : vector<8x4xi1>, vector<8x4xf32>
    %30 = vector.shape_cast %24 : vector<8x1xi32> to vector<8x1xi32>
    %31 = vector.broadcast %30 : vector<8x1xi32> to vector<8x4xi32>
    %32 = arith.select %26, %31, %5 : vector<8x4xi1>, vector<8x4xi32>
    %c32_i32_7 = arith.constant 32 : i32
    %33 = vector.broadcast %c32_i32_7 : i32 to vector<8x128xi32>
    %34 = arith.cmpi sge, %1, %33 : vector<8x128xi32>
    %c64_i32 = arith.constant 64 : i32
    %35 = vector.broadcast %c64_i32 : i32 to vector<8x128xi32>
    %36 = arith.cmpi slt, %1, %35 : vector<8x128xi32>
    %37 = arith.andi %34, %36 : vector<8x128xi1>
    %cst_8 = arith.constant 0xFF800000 : f32
    %38 = vector.broadcast %cst_8 : f32 to vector<8x128xf32>
    %39 = arith.select %37, %0, %38 : vector<8x128xi1>, vector<8x128xf32>
    %cst_9 = arith.constant dense<0xFF800000> : vector<8xf32>
    %40 = vector.multi_reduction <maximumf>, %39, %cst_9 [1] : vector<8x128xf32> to vector<8xf32>
    %41 = vector.shape_cast %40 : vector<8xf32> to vector<8x1xf32>
    %42 = vector.broadcast %41 : vector<8x1xf32> to vector<8x128xf32>
    %43 = arith.cmpf oeq, %0, %42 : vector<8x128xf32>
    %44 = arith.ori %43, %2 : vector<8x128xi1>
    %45 = arith.andi %44, %37 : vector<8x128xi1>
    %c32_i32_10 = arith.constant 32 : i32
    %46 = vector.broadcast %c32_i32_10 : i32 to vector<8x128xi32>
    %47 = arith.subi %1, %46 : vector<8x128xi32>
    %c31_i32_11 = arith.constant 31 : i32
    %48 = vector.broadcast %c31_i32_11 : i32 to vector<8x128xi32>
    %49 = arith.select %45, %47, %48 : vector<8x128xi1>, vector<8x128xi32>
    %cst_12 = arith.constant dense<2147483647> : vector<8xi32>
    %50 = vector.multi_reduction <minsi>, %49, %cst_12 [1] : vector<8x128xi32> to vector<8xi32>
    %51 = vector.shape_cast %50 : vector<8xi32> to vector<8x1xi32>
    %c1_i32 = arith.constant 1 : i32
    %52 = vector.broadcast %c1_i32 : i32 to vector<8x4xi32>
    %53 = arith.cmpi eq, %3, %52 : vector<8x4xi32>
    %54 = vector.shape_cast %41 : vector<8x1xf32> to vector<8x1xf32>
    %55 = vector.broadcast %54 : vector<8x1xf32> to vector<8x4xf32>
    %56 = arith.select %53, %55, %29 : vector<8x4xi1>, vector<8x4xf32>
    %57 = vector.shape_cast %51 : vector<8x1xi32> to vector<8x1xi32>
    %58 = vector.broadcast %57 : vector<8x1xi32> to vector<8x4xi32>
    %59 = arith.select %53, %58, %32 : vector<8x4xi1>, vector<8x4xi32>
    %c64_i32_13 = arith.constant 64 : i32
    %60 = vector.broadcast %c64_i32_13 : i32 to vector<8x128xi32>
    %61 = arith.cmpi sge, %1, %60 : vector<8x128xi32>
    %c96_i32 = arith.constant 96 : i32
    %62 = vector.broadcast %c96_i32 : i32 to vector<8x128xi32>
    %63 = arith.cmpi slt, %1, %62 : vector<8x128xi32>
    %64 = arith.andi %61, %63 : vector<8x128xi1>
    %cst_14 = arith.constant 0xFF800000 : f32
    %65 = vector.broadcast %cst_14 : f32 to vector<8x128xf32>
    %66 = arith.select %64, %0, %65 : vector<8x128xi1>, vector<8x128xf32>
    %cst_15 = arith.constant dense<0xFF800000> : vector<8xf32>
    %67 = vector.multi_reduction <maximumf>, %66, %cst_15 [1] : vector<8x128xf32> to vector<8xf32>
    %68 = vector.shape_cast %67 : vector<8xf32> to vector<8x1xf32>
    %69 = vector.broadcast %68 : vector<8x1xf32> to vector<8x128xf32>
    %70 = arith.cmpf oeq, %0, %69 : vector<8x128xf32>
    %71 = arith.ori %70, %2 : vector<8x128xi1>
    %72 = arith.andi %71, %64 : vector<8x128xi1>
    %c64_i32_16 = arith.constant 64 : i32
    %73 = vector.broadcast %c64_i32_16 : i32 to vector<8x128xi32>
    %74 = arith.subi %1, %73 : vector<8x128xi32>
    %c31_i32_17 = arith.constant 31 : i32
    %75 = vector.broadcast %c31_i32_17 : i32 to vector<8x128xi32>
    %76 = arith.select %72, %74, %75 : vector<8x128xi1>, vector<8x128xi32>
    %cst_18 = arith.constant dense<2147483647> : vector<8xi32>
    %77 = vector.multi_reduction <minsi>, %76, %cst_18 [1] : vector<8x128xi32> to vector<8xi32>
    %78 = vector.shape_cast %77 : vector<8xi32> to vector<8x1xi32>
    %c2_i32 = arith.constant 2 : i32
    %79 = vector.broadcast %c2_i32 : i32 to vector<8x4xi32>
    %80 = arith.cmpi eq, %3, %79 : vector<8x4xi32>
    %81 = vector.shape_cast %68 : vector<8x1xf32> to vector<8x1xf32>
    %82 = vector.broadcast %81 : vector<8x1xf32> to vector<8x4xf32>
    %83 = arith.select %80, %82, %56 : vector<8x4xi1>, vector<8x4xf32>
    %84 = vector.shape_cast %78 : vector<8x1xi32> to vector<8x1xi32>
    %85 = vector.broadcast %84 : vector<8x1xi32> to vector<8x4xi32>
    %86 = arith.select %80, %85, %59 : vector<8x4xi1>, vector<8x4xi32>
    %c96_i32_19 = arith.constant 96 : i32
    %87 = vector.broadcast %c96_i32_19 : i32 to vector<8x128xi32>
    %88 = arith.cmpi sge, %1, %87 : vector<8x128xi32>
    %c128_i32 = arith.constant 128 : i32
    %89 = vector.broadcast %c128_i32 : i32 to vector<8x128xi32>
    %90 = arith.cmpi slt, %1, %89 : vector<8x128xi32>
    %91 = arith.andi %88, %90 : vector<8x128xi1>
    %cst_20 = arith.constant 0xFF800000 : f32
    %92 = vector.broadcast %cst_20 : f32 to vector<8x128xf32>
    %93 = arith.select %91, %0, %92 : vector<8x128xi1>, vector<8x128xf32>
    %cst_21 = arith.constant dense<0xFF800000> : vector<8xf32>
    %94 = vector.multi_reduction <maximumf>, %93, %cst_21 [1] : vector<8x128xf32> to vector<8xf32>
    %95 = vector.shape_cast %94 : vector<8xf32> to vector<8x1xf32>
    %96 = vector.broadcast %95 : vector<8x1xf32> to vector<8x128xf32>
    %97 = arith.cmpf oeq, %0, %96 : vector<8x128xf32>
    %98 = arith.ori %97, %2 : vector<8x128xi1>
    %99 = arith.andi %98, %91 : vector<8x128xi1>
    %c96_i32_22 = arith.constant 96 : i32
    %100 = vector.broadcast %c96_i32_22 : i32 to vector<8x128xi32>
    %101 = arith.subi %1, %100 : vector<8x128xi32>
    %c31_i32_23 = arith.constant 31 : i32
    %102 = vector.broadcast %c31_i32_23 : i32 to vector<8x128xi32>
    %103 = arith.select %99, %101, %102 : vector<8x128xi1>, vector<8x128xi32>
    %cst_24 = arith.constant dense<2147483647> : vector<8xi32>
    %104 = vector.multi_reduction <minsi>, %103, %cst_24 [1] : vector<8x128xi32> to vector<8xi32>
    %105 = vector.shape_cast %104 : vector<8xi32> to vector<8x1xi32>
    %c3_i32 = arith.constant 3 : i32
    %106 = vector.broadcast %c3_i32 : i32 to vector<8x4xi32>
    %107 = arith.cmpi eq, %3, %106 : vector<8x4xi32>
    %108 = vector.shape_cast %95 : vector<8x1xf32> to vector<8x1xf32>
    %109 = vector.broadcast %108 : vector<8x1xf32> to vector<8x4xf32>
    %110 = arith.select %107, %109, %83 : vector<8x4xi1>, vector<8x4xf32>
    %111 = vector.shape_cast %105 : vector<8x1xi32> to vector<8x1xi32>
    %112 = vector.broadcast %111 : vector<8x1xi32> to vector<8x4xi32>
    %113 = arith.select %107, %112, %86 : vector<8x4xi1>, vector<8x4xi32>
    %cst_25 = arith.constant 1.000000e+00 : f32
    %114 = vector.broadcast %cst_25 : f32 to vector<8x4xf32>
    %115 = arith.addf %110, %114 : vector<8x4xf32>
    %c0_26 = arith.constant 0 : index
    %c0_27 = arith.constant 0 : index
    %116 = vector.load %arg2[%c0_26, %c0_27] : memref<8x4xf32, #tpu.memory_space<vmem>>, vector<8x4xf32>
    tpu.vector_store %arg2[%c0_26, %c0_27], %115 {strides = array<i32>} : memref<8x4xf32, #tpu.memory_space<vmem>>, vector<8x4xf32>,
    %c1_i32_28 = arith.constant 1 : i32
    %117 = vector.broadcast %c1_i32_28 : i32 to vector<8x4xi32>
    %118 = arith.addi %113, %117 : vector<8x4xi32>
    %c0_29 = arith.constant 0 : index
    %c0_30 = arith.constant 0 : index
    %119 = vector.load %arg3[%c0_29, %c0_30] : memref<8x4xi32, #tpu.memory_space<vmem>>, vector<8x4xi32>
    tpu.vector_store %arg3[%c0_29, %c0_30], %118 {strides = array<i32>} : memref<8x4xi32, #tpu.memory_space<vmem>>, vector<8x4xi32>,
    return
  }
  func.func @transform_0(%arg0: i32) -> (i32, i32) {
    %c0_i32 = arith.constant 0 : i32
    %c0_i32_0 = arith.constant 0 : i32
    return %arg0, %c0_i32 : i32, i32
  }
  func.func @transform_1(%arg0: i32) -> (i32, i32) {
    %c0_i32 = arith.constant 0 : i32
    %c0_i32_0 = arith.constant 0 : i32
    return %arg0, %c0_i32 : i32, i32
  }
  func.func @transform_2(%arg0: i32) -> (i32, i32) {
    %c0_i32 = arith.constant 0 : i32
    %c0_i32_0 = arith.constant 0 : i32
    return %arg0, %c0_i32 : i32, i32
  }
}

</mosaic_0001>

<llo_original>
// kernel: tpu_custom_call.1
$region0: #{tpu_custom_call.1}
  #allocation0 [shape = 'u32[]', space=smem, size = 0x4, offset = 0x4, fixed_abs, tag = 'smem constant byte address 0x4 - core index']
  #allocation1 [shape = 'u32[72,128]{1,0:T(1,128)}', space=vmem, size = 0x9000, scoped, tag = 'internal scratch']
  %s0 = inlined_call_operand.hbm [shape: f32[8,128], index: 0, kind: input, shape index: {}]
  %s1 = inlined_call_operand.vmem [shape: f32[8,4], index: 1, kind: output, shape index: {0}]
  %s2 = inlined_call_operand.vmem [shape: s32[8,4], index: 2, kind: output, shape index: {1}]
  %3 = xla_tuple %s1, %s2
  %s4 = sld [smem:[#allocation0]]
  $region26: #{tpu_custom_call.1} parent=0
    _
  %s6 = ssub.s32 1, %s4
  %s7 = scalar_select 0, %s6, %s4
  $region1: #{tpu_custom_call.1} parent=0
    #allocation2 [shape = 'u8[4096]{0}', space=vmem, size = 0x1000, scoped, tag = 'input window, operand 0, single buffered']
    #allocation3 [shape = 's32[1]{0}', space=sflag, size = 0x4, scoped, tag = 'scoped memory for tpu_custom_call.1']
    %8 = vsyncpa [#allocation3], 0
    // Predicated region
    $region2: #{tpu_custom_call.1} parent=1 // pred_check
      _
    $region3: #{tpu_custom_call.1} parent=1 // pred_check_branch
      %10 = sbr.rel (0) target = $region5
    $region4: #{tpu_custom_call.1} parent=1 // pred_region
      %12 = vsyncadd [#allocation3], 0
      %s14 = sshll.u32 %s0, 4
      %s15 = int_to_ptr.hbm [resolvable:$true] %s14
      %s16 = sshll.u32 [#allocation2], 4
      %s17 = int_to_ptr.vmem [resolvable:$true] %s16
      %19 = dma.hbm_to_vmem [thread:$0]  %s15, 128, %s17, [#allocation3]
    $region5: #{tpu_custom_call.1} parent=1 // pred_fallthru
      _
    // Predicated region
    $region6: #{tpu_custom_call.1} parent=1 // pred_check
      _
    $region7: #{tpu_custom_call.1} parent=1 // pred_check_branch
      %21 = sbr.rel (0) target = $region9
    $region8: #{tpu_custom_call.1} parent=1 // pred_region
      %23 = dma.done [#allocation3], 128
    $region9: #{tpu_custom_call.1} parent=1 // pred_fallthru
      _
    %v24 = vld [vmem:[#allocation2] sm:$0xff]
    %v25 = vlaneseq
    %v26 = vand.u32 %v25, 127
    %vm27 = vcmp.ne.f32.partialorder %v24, %v24
    %vm28 = vcmp.ge.s32.totalorder %v26, 0
    %vm29 = vcmp.lt.s32.totalorder %v26, 32
    %vm30 = vmand %vm28, %vm29
    %v31 = vsel %vm30, %v24, -inf
    %32 = vmax.xlane.f32.xlu0 %v31
    %v33 = vpop.xlane.xlu0 %32
    %vm34 = vcmp.eq.f32.partialorder %v24, %v33
    %vm35 = vmor %vm34, %vm27
    %vm36 = vmand %vm35, %vm30
    %v37 = vsel %vm36, %v26, 31
    %v38 = vand.u32 %v37, 65535
    %v39 = vshra.s32 %v37, 16
    %v40 = vcvt.s32.f32 %v38
    %v41 = vcvt.s32.f32 %v39
    %42 = vmin.xlane.f32.xlu0 %v41
    %v43 = vpop.xlane.xlu0 %42
    %vm44 = vcmp.eq.f32.partialorder %v41, %v43
    %v45 = vsel %vm44, %v40, inf
    %46 = vmin.xlane.f32.xlu0 %v45
    %v47 = vpop.xlane.xlu0 %46
    %v48 = vcvt.f32.s32 %v47
    %v49 = vcvt.f32.s32 %v43
    %v50 = vshll.u32 %v49, 16
    %v51 = vadd.s32 %v50, %v48
    %vm52 = vcmp.eq.s32.totalorder %v26, 0
    %v53 = vsel %vm52, %v33, 0.0
    %v54 = vsel %vm52, %v51, 0
    %vm55 = vcmp.ge.s32.totalorder %v26, 32
    %vm56 = vcmp.lt.s32.totalorder %v26, 64
    %vm57 = vmand %vm55, %vm56
    %v58 = vsel %vm57, %v24, -inf
    %59 = vmax.xlane.f32.xlu0 %v58
    %v60 = vpop.xlane.xlu0 %59
    %vm61 = vcmp.eq.f32.partialorder %v24, %v60
    %vm62 = vmor %vm61, %vm27
    %vm63 = vmand %vm62, %vm57
    %v64 = vsub.s32 %v26, 32
    %v65 = vsel %vm63, %v64, 31
    %v66 = vand.u32 %v65, 65535
    %v67 = vshra.s32 %v65, 16
    %v68 = vcvt.s32.f32 %v66
    %v69 = vcvt.s32.f32 %v67
    %70 = vmin.xlane.f32.xlu0 %v69
    %v71 = vpop.xlane.xlu0 %70
    %vm72 = vcmp.eq.f32.partialorder %v69, %v71
    %v73 = vsel %vm72, %v68, inf
    %74 = vmin.xlane.f32.xlu0 %v73
    %v75 = vpop.xlane.xlu0 %74
    %v76 = vcvt.f32.s32 %v75
    %v77 = vcvt.f32.s32 %v71
    %v78 = vshll.u32 %v77, 16
    %v79 = vadd.s32 %v78, %v76
    %vm80 = vcmp.eq.s32.totalorder %v26, 1
    %v81 = vsel %vm80, %v60, %v53
    %v82 = vsel %vm80, %v79, %v54
    %vm83 = vcmp.ge.s32.totalorder %v26, 64
    %vm84 = vcmp.lt.s32.totalorder %v26, 96
    %vm85 = vmand %vm83, %vm84
    %v86 = vsel %vm85, %v24, -inf
    %87 = vmax.xlane.f32.xlu0 %v86
    %v88 = vpop.xlane.xlu0 %87
    %vm89 = vcmp.eq.f32.partialorder %v24, %v88
    %vm90 = vmor %vm89, %vm27
    %vm91 = vmand %vm90, %vm85
    %v92 = vsub.s32 %v26, 64
    %v93 = vsel %vm91, %v92, 31
    %v94 = vand.u32 %v93, 65535
    %v95 = vshra.s32 %v93, 16
    %v96 = vcvt.s32.f32 %v94
    %v97 = vcvt.s32.f32 %v95
    %98 = vmin.xlane.f32.xlu0 %v97
    %v99 = vpop.xlane.xlu0 %98
    %vm100 = vcmp.eq.f32.partialorder %v97, %v99
    %v101 = vsel %vm100, %v96, inf
    %102 = vmin.xlane.f32.xlu0 %v101
    %v103 = vpop.xlane.xlu0 %102
    %v104 = vcvt.f32.s32 %v103
    %v105 = vcvt.f32.s32 %v99
    %v106 = vshll.u32 %v105, 16
    %v107 = vadd.s32 %v106, %v104
    %vm108 = vcmp.eq.s32.totalorder %v26, 2
    %v109 = vsel %vm108, %v88, %v81
    %v110 = vsel %vm108, %v107, %v82
    %vm111 = vcmp.ge.s32.totalorder %v26, 96
    %vm112 = vcmp.lt.s32.totalorder %v26, 128
    %vm113 = vmand %vm111, %vm112
    %v114 = vsel %vm113, %v24, -inf
    %115 = vmax.xlane.f32.xlu0 %v114
    %v116 = vpop.xlane.xlu0 %115
    %vm117 = vcmp.eq.f32.partialorder %v24, %v116
    %vm118 = vmor %vm117, %vm27
    %vm119 = vmand %vm118, %vm113
    %v120 = vsub.s32 %v26, 96
    %v121 = vsel %vm119, %v120, 31
    %v122 = vand.u32 %v121, 65535
    %v123 = vshra.s32 %v121, 16
    %v124 = vcvt.s32.f32 %v122
    %v125 = vcvt.s32.f32 %v123
    %126 = vmin.xlane.f32.xlu0 %v125
    %v127 = vpop.xlane.xlu0 %126
    %vm128 = vcmp.eq.f32.partialorder %v125, %v127
    %v129 = vsel %vm128, %v124, inf
    %130 = vmin.xlane.f32.xlu0 %v129
    %v131 = vpop.xlane.xlu0 %130
    %v132 = vcvt.f32.s32 %v131
    %v133 = vcvt.f32.s32 %v127
    %v134 = vshll.u32 %v133, 16
    %v135 = vadd.s32 %v134, %v132
    %vm136 = vcmp.eq.s32.totalorder %v26, 3
    %v137 = vsel %vm136, %v116, %v109
    %v138 = vsel %vm136, %v135, %v110
    %v139 = vadd.f32 %v137, 1.0
    %vm140 = vcmask 31744
    %141 = vst.msk [vmem:[%s1] sm:$0xff] %vm140, %v139
    %v142 = vadd.s32 %v138, 1
    %143 = vst.msk [vmem:[%s2] sm:$0xff] %vm140, %v142
    // Predicated region
    $region10: #{tpu_custom_call.1} parent=1 // pred_check
      _
    $region11: #{tpu_custom_call.1} parent=1 // pred_check_branch
      %145 = sbr.rel (0) target = $region13
    $region12: #{tpu_custom_call.1} parent=1 // pred_region
      _
    $region13: #{tpu_custom_call.1} parent=1 // pred_fallthru
      _
    // Predicated region
    $region14: #{tpu_custom_call.1} parent=1 // pred_check
      _
    $region15: #{tpu_custom_call.1} parent=1 // pred_check_branch
      %147 = sbr.rel (0) target = $region17
    $region16: #{tpu_custom_call.1} parent=1 // pred_region
      _
    $region17: #{tpu_custom_call.1} parent=1 // pred_fallthru
      _
    // Predicated region
    $region18: #{tpu_custom_call.1} parent=1 // pred_check
      _
    $region19: #{tpu_custom_call.1} parent=1 // pred_check_branch
      %149 = sbr.rel (0) target = $region21
    $region20: #{tpu_custom_call.1} parent=1 // pred_region
      _
    $region21: #{tpu_custom_call.1} parent=1 // pred_fallthru
      _
    // Predicated region
    $region22: #{tpu_custom_call.1} parent=1 // pred_check
      _
    $region23: #{tpu_custom_call.1} parent=1 // pred_check_branch
      %151 = sbr.rel (0) target = $region25
    $region24: #{tpu_custom_call.1} parent=1 // pred_region
      _
    $region25: #{tpu_custom_call.1} parent=1 // pred_fallthru
      _
    %152 = vsyncpa [#allocation3], 1

</llo_original>
